<compile_context>
chip_gen: v7x
topology: tpu7x:2x2x1
jax: 0.10.0
libtpu: 0.0.40
codegen_flags: <defaults>
</compile_context>

<pallas_src>
import functools

import jax
import jax.numpy as jnp
from jax.experimental import pallas as pl
from jax.experimental.pallas import tpu as pltpu


def _clip_embedding_kernel(ts, tok_ref, table_hbm, pos_ref, out_ref,
                           gather_buf, sems):
    # tok_ref:    (B, S) int32 in SMEM (scalar prefetch) -- addressing only.
    # table_hbm:  (V, E) raw HBM ref (memory_space=pl.ANY), gathered manually.
    # pos_ref:    (T, E) VMEM-resident positional table (block index constant).
    # out_ref:    (1, TS, E) output tile.
    # gather_buf: (TS, E) VMEM scratch for the gathered table rows.
    # sems:       (TS,) DMA semaphores -- one per in-flight row gather.
    b = pl.program_id(0)
    st = pl.program_id(1)
    s0 = pl.multiple_of(st * ts, ts)

    # Issue all TS row-gather DMAs before waiting on any of them, so the tiny
    # per-row transfers are concurrent (latency hiding) instead of serialized.
    @pl.loop(0, ts)
    def _start(i):
        tok = tok_ref[b, s0 + i]
        pltpu.make_async_copy(
            table_hbm.at[pl.ds(tok, 1), :],
            gather_buf.at[pl.ds(i, 1), :],
            sems.at[i],
        ).start()

    @pl.loop(0, ts)
    def _wait(i):
        pltpu.make_async_copy(
            table_hbm.at[pl.ds(0, 1), :],     # dummy src; wait only needs dst/sem
            gather_buf.at[pl.ds(i, 1), :],
            sems.at[i],
        ).wait()

    # One dense (TS, E) vector add, fused with the gather; pos rows come from
    # the VMEM-resident positional table.
    out_ref[0] = gather_buf[...] + pos_ref[pl.ds(s0, ts), :]


def clip_embedding(tokens, table, pos, *, tile_s=None):
    """tokens: (B, S) int; table: (V, E) f32; pos: (T, E) f32 -> (B, S, E) f32.

    Matches `table[tokens] + pos` (the PyTorch forward).  Requires S <= T and
    matching embedding width; token ids are clamped to [0, V) instead of
    raising like nn.Embedding.
    """
    B, S = tokens.shape
    V, E = table.shape
    T, E2 = pos.shape
    assert E == E2, "embedding widths of table and positional table must match"
    assert S <= T, "sequence length must not exceed the positional table size"

    if tile_s is None:
        # Largest sequence tile (>= 8 sublanes) that divides S; fall back to S.
        tile_s = next((t for t in (64, 32, 16, 8) if S % t == 0), S)
    assert S % tile_s == 0, "S must be divisible by the sequence tile"

    tokens = jnp.clip(tokens.astype(jnp.int32), 0, V - 1)

    kernel = functools.partial(_clip_embedding_kernel, tile_s)

    return pl.pallas_call(
        kernel,
        out_shape=jax.ShapeDtypeStruct((B, S, E), table.dtype),
        grid_spec=pltpu.PrefetchScalarGridSpec(
            num_scalar_prefetch=1,          # tokens -> SMEM
            grid=(B, S // tile_s),
            in_specs=[
                # Embedding table stays in HBM; gathered row-by-row in-kernel.
                pl.BlockSpec(memory_space=pl.ANY),
                # Positional table: constant block index -> DMA'd once,
                # VMEM-resident for the whole grid.
                pl.BlockSpec((T, E), lambda b, st, tok: (0, 0)),
            ],
            out_specs=pl.BlockSpec((1, tile_s, E), lambda b, st, tok: (b, st, 0)),
            scratch_shapes=[
                pltpu.VMEM((tile_s, E), table.dtype),
                pltpu.SemaphoreType.DMA((tile_s,)),
            ],
        ),
        compiler_params=pltpu.CompilerParams(
            dimension_semantics=("parallel", "parallel"),
        ),
    )(tokens, table, pos)


if __name__ == "__main__":
    # Small shapes consistent with the module's forward:
    #   nVocab=256, nTokens=128, nEmbedd=128 (== nTokens, required by the
    #   module's `x += positionalEmbedding` broadcast), batch=2, seq=128.
    # E = 128 keeps the lane dimension dense (multiple of 128).
    nVocab, nTokens, nEmbedd = 256, 128, 128
    B, S = 2, nTokens

    key = jax.random.PRNGKey(0)
    k_tok, k_tab, k_pos = jax.random.split(key, 3)

    tokens = jax.random.randint(k_tok, (B, S), 0, nVocab, dtype=jnp.int32)
    # nn.Embedding weight ~ N(0, 1); positionalEmbedding is initialized to
    # zeros in __init__, but we use a random init so the fused add is exercised.
    table = jax.random.normal(k_tab, (nVocab, nTokens), dtype=jnp.float32)
    pos = jax.random.normal(k_pos, (nTokens, nEmbedd), dtype=jnp.float32)

    out = clip_embedding(tokens, table, pos)
    out = jax.block_until_ready(out)

    # Pure-JAX reference of the PyTorch forward.
    ref = table[tokens] + pos  # (B, S, nTokens) + (nTokens, nEmbedd)

    assert out.shape == (B, S, nEmbedd), out.shape
    assert jnp.allclose(out, ref, atol=1e-6, rtol=1e-6), "mismatch vs reference"
    print("KERNEL_OK")
</pallas_src>

<mosaic_0001>
module attributes {stable_mosaic.version = 11 : i64} {
  func.func @_clip_embedding_kernel(%arg0: i32, %arg1: i32, %arg2: memref<2x128xi32, #tpu.memory_space<smem>>, %arg3: memref<256x128xf32, #tpu.memory_space<any>>, %arg4: memref<128x128xf32, #tpu.memory_space<vmem>>, %arg5: memref<1x64x128xf32, #tpu.memory_space<vmem>>, %arg6: memref<64x128xf32, #tpu.memory_space<vmem>>, %arg7: memref<64x!tpu.dma_semaphore, #tpu.memory_space<semaphore_mem>>) attributes {dimension_semantics = [#tpu.dimension_semantics<parallel>, #tpu.dimension_semantics<parallel>], iteration_bounds = array<i64: 2, 2>, scalar_prefetch = 1 : i64, scratch_operands = 2 : i64, tpu.core_type = #tpu.core_type<tc>, window_params = [{}, {pipeline_mode = #tpu.pipeline_mode<synchronous>, transform_indices = @transform_1, window_bounds = array<i64: 128, 128>}, {transform_indices = @transform_2, window_bounds = array<i64: 1, 64, 128>}]} {
    %c64_i32 = arith.constant 64 : i32
    %0 = arith.muli %arg1, %c64_i32 : i32
    %1 = tpu.assume_multiple %0, 64 : i32
    %c0_i32 = arith.constant 0 : i32
    %c64_i32_0 = arith.constant 64 : i32
    %2 = arith.addi %c0_i32, %c64_i32_0 : i32
    %c1_i32 = arith.constant 1 : i32
    scf.for %arg8 = %c0_i32 to %2 step %c1_i32  : i32 {
      %c1_i32_11 = arith.constant 1 : i32
      %11 = arith.muli %arg8, %c1_i32_11 : i32
      %c0_i32_12 = arith.constant 0 : i32
      %12 = arith.addi %c0_i32_12, %11 : i32
      %13 = arith.addi %1, %12 : i32
      %14 = arith.index_cast %arg0 : i32 to index
      %15 = arith.index_cast %13 : i32 to index
      %16 = memref.load %arg2[%14, %15] : memref<2x128xi32, #tpu.memory_space<smem>>
      %c0_i32_13 = arith.constant 0 : i32
      %17 = tpu.memref_slice %arg3[%16, %c0_i32_13] : memref<256x128xf32, #tpu.memory_space<any>> -> memref<1x128xf32, #tpu.memory_space<any>>
      %c0_i32_14 = arith.constant 0 : i32
      %18 = tpu.memref_slice %arg6[%12, %c0_i32_14] : memref<64x128xf32, #tpu.memory_space<vmem>> -> memref<1x128xf32, #tpu.memory_space<vmem>>
      %19 = tpu.memref_slice %arg7[%12] : memref<64x!tpu.dma_semaphore, #tpu.memory_space<semaphore_mem>> -> memref<1x!tpu.dma_semaphore, #tpu.memory_space<semaphore_mem>>
      %20 = tpu.memref_squeeze %19 : memref<1x!tpu.dma_semaphore, #tpu.memory_space<semaphore_mem>> -> memref<!tpu.dma_semaphore, #tpu.memory_space<semaphore_mem>>
      tpu.enqueue_dma source(%17 : memref<1x128xf32, #tpu.memory_space<any>>) target(%18 : memref<1x128xf32, #tpu.memory_space<vmem>>) target_semaphore(%20 : memref<!tpu.dma_semaphore, #tpu.memory_space<semaphore_mem>>)
    }
    %c64_i32_1 = arith.constant 64 : i32
    %c0_i32_2 = arith.constant 0 : i32
    %c64_i32_3 = arith.constant 64 : i32
    %3 = arith.addi %c0_i32_2, %c64_i32_3 : i32
    %c1_i32_4 = arith.constant 1 : i32
    scf.for %arg8 = %c0_i32_2 to %3 step %c1_i32_4  : i32 {
      %c1_i32_11 = arith.constant 1 : i32
      %11 = arith.muli %arg8, %c1_i32_11 : i32
      %c0_i32_12 = arith.constant 0 : i32
      %12 = arith.addi %c0_i32_12, %11 : i32
      %c0_i32_13 = arith.constant 0 : i32
      %c0_i32_14 = arith.constant 0 : i32
      %13 = tpu.memref_slice %arg3[%c0_i32_13, %c0_i32_14] : memref<256x128xf32, #tpu.memory_space<any>> -> memref<1x128xf32, #tpu.memory_space<any>>
      %c0_i32_15 = arith.constant 0 : i32
      %14 = tpu.memref_slice %arg6[%12, %c0_i32_15] : memref<64x128xf32, #tpu.memory_space<vmem>> -> memref<1x128xf32, #tpu.memory_space<vmem>>
      %15 = tpu.memref_slice %arg7[%12] : memref<64x!tpu.dma_semaphore, #tpu.memory_space<semaphore_mem>> -> memref<1x!tpu.dma_semaphore, #tpu.memory_space<semaphore_mem>>
      %16 = tpu.memref_squeeze %15 : memref<1x!tpu.dma_semaphore, #tpu.memory_space<semaphore_mem>> -> memref<!tpu.dma_semaphore, #tpu.memory_space<semaphore_mem>>
      tpu.wait_dma2 semaphore(%16 : memref<!tpu.dma_semaphore, #tpu.memory_space<semaphore_mem>>) src(%13 : memref<1x128xf32, #tpu.memory_space<any>>) dst(%14 : memref<1x128xf32, #tpu.memory_space<vmem>>)
    }
    %c64_i32_5 = arith.constant 64 : i32
    %c0 = arith.constant 0 : index
    %c0_6 = arith.constant 0 : index
    %4 = vector.load %arg6[%c0, %c0_6] : memref<64x128xf32, #tpu.memory_space<vmem>>, vector<64x128xf32>
    %5 = arith.index_cast %1 : i32 to index
    %c0_7 = arith.constant 0 : index
    %6 = vector.load %arg4[%5, %c0_7] : memref<128x128xf32, #tpu.memory_space<vmem>>, vector<64x128xf32>
    %7 = arith.addf %4, %6 : vector<64x128xf32>
    %c0_8 = arith.constant 0 : index
    %c0_9 = arith.constant 0 : index
    %c0_10 = arith.constant 0 : index
    %8 = vector.load %arg5[%c0_8, %c0_9, %c0_10] : memref<1x64x128xf32, #tpu.memory_space<vmem>>, vector<1x64x128xf32>
    %9 = vector.shape_cast %8 : vector<1x64x128xf32> to vector<64x128xf32>
    %10 = vector.shape_cast %7 : vector<64x128xf32> to vector<1x64x128xf32>
    tpu.vector_store %arg5[%c0_8, %c0_9, %c0_10], %10 {strides = array<i32>} : memref<1x64x128xf32, #tpu.memory_space<vmem>>, vector<1x64x128xf32>,
    return
  }
  func.func @transform_1(%arg0: i32, %arg1: i32, %arg2: memref<2x128xi32, #tpu.memory_space<smem>>) -> (i32, i32) {
    %c0_i32 = arith.constant 0 : i32
    %c0_i32_0 = arith.constant 0 : i32
    %c0_i32_1 = arith.constant 0 : i32
    return %c0_i32, %c0_i32_0 : i32, i32
  }
  func.func @transform_2(%arg0: i32, %arg1: i32, %arg2: memref<2x128xi32, #tpu.memory_space<smem>>) -> (i32, i32, i32) {
    %c0_i32 = arith.constant 0 : i32
    %c0_i32_0 = arith.constant 0 : i32
    return %arg0, %arg1, %c0_i32 : i32, i32, i32
  }
}

</mosaic_0001>

<llo_original>
// kernel: tpu_custom_call.1
$region0: #{tpu_custom_call.1}
  #allocation0 [shape = 'u32[]', space=smem, size = 0x4, offset = 0x4, fixed_abs, tag = 'smem constant byte address 0x4 - core index']
  #allocation1 [shape = 'u32[144,128]{1,0:T(1,128)}', space=vmem, size = 0x12000, scoped, tag = 'internal scratch']
  #allocation2 [shape = 'f32[64,128]{1,0:T(8,128)}', space=vmem, size = 0x8000, scoped, tag = 'scratch operand']
  #allocation3 [shape = 's32[64]{0}', space=sflag, size = 0x100, scoped, tag = 'scratch operand']
  #allocation4 [shape = 's32[1]{0}', space=sflag, size = 0x4, scoped, tag = 'scoped memory for tpu_custom_call.1']
  #allocation5 [shape = 'u8[1024]{0}', space=smem, size = 0x400, scoped, tag = 'prefetched SMEM operand 0']
  #allocation10 [shape = 's32[]', space=sflag, size = 0x4, offset = 0, fixed_abs, tag = 'sflag constant byte address 0x0 - dummy sync flag']
  #allocation11 [shape = 's32[]', space=sflag, size = 0x4, offset = 0, fixed_abs, tag = 'sflag constant byte address 0x0 - dummy sync flag']
  #allocation12 [shape = 'u32[]', space=smem, size = 0x4, offset = 0x44, fixed_abs, tag = 'smem constant byte address 0x44 - assertion arg 0']
  #allocation13 [shape = 'u32[]', space=smem, size = 0x4, offset = 0x48, fixed_abs, tag = 'smem constant byte address 0x48 - assertion arg 1']
  %s0 = inlined_call_operand.hbm [shape: s32[2,128], index: 0, kind: input, shape index: {}]
  %s1 = inlined_call_operand.hbm [shape: f32[256,128], index: 1, kind: input, shape index: {}]
  %s2 = inlined_call_operand.hbm [shape: f32[128,128], index: 2, kind: input, shape index: {}]
  %s3 = inlined_call_operand.hbm [shape: f32[2,128,128], index: 3, kind: output, shape index: {}]
  %s4 = sld [smem:[#allocation0]]
  $region59: #{tpu_custom_call.1} parent=0
    _
  %s6 = ssub.s32 1, %s4
  %s7 = scalar_select 0, %s6, %s4
  %9 = dma.hbm_to_smem %s0, 32, [#allocation5], [#allocation4]
  %10 = dma.done [#allocation4], 32
  %11 = sfence
  $region1: #{tpu_custom_call.1} parent=0
    #allocation6 [shape = 'u8[65536]{0}', space=vmem, size = 0x10000, scoped, tag = 'input window, operand 2, single buffered']
    #allocation7 [shape = 's32[2]{0}', space=sflag, size = 0x8, scoped, tag = 'scoped memory for tpu_custom_call.1']
    #allocation8 [shape = 's32[2]{0}', space=sflag, size = 0x8, scoped, tag = 'scoped memory for tpu_custom_call.1']
    #allocation9 [shape = 'u8[65536]{0}', space=vmem, size = 0x10000, scoped, tag = 'output window, operand 0']
    %12 = vsyncpa [#allocation7], 0
    %13 = vsyncpa [#allocation8], 0
    %s14 = scalar_lea.sflag [#allocation8], 1
    %15 = vsyncpa %s14, 0
    loop: start=0, step=1, limit=6
    $region2: #{tpu_custom_call.1} parent=1 // loop_pre_header
      _
    $region3: #{tpu_custom_call.1} parent=1 // loop_header
      %s17 = sphi 0, %s21
      %p18 = scmp.ge.s32.totalorder %s17, 6
      %s24 = sphi 0, %s36
      %s25 = sphi 0, %s32
      %s26 = sphi 0, %s24
      %s27 = sphi 0, %s25
      %s28 = sphi 0, %s26
      %s29 = sphi 0, %s27
      %s37 = sphi 0, %s37
      %s39 = sphi 0, %s37
      %s40 = sphi 0, %s39
      %s54 = sphi 0, %s40
      %s62 = sphi 0, %s64
      %s65 = sphi 0, %s62
      %s66 = sphi 0, %s65
      %s82 = sphi 0, %s66
    $region4: #{tpu_custom_call.1} parent=1 // loop_header_branch
      %20 = sbr.rel (%p18) target = $region8
    $region5: #{tpu_custom_call.1} parent=1 // loop_body
      %s22 = ssub.s32 %s17, 1
      %s23 = ssub.s32 %s17, 2
      %s30 = sadd.s32 1, %s25
      %p31 = scmp.ge.s32.totalorder %s30, 2
      %s32 = scalar_select %p31, 0, %s30
      %s33 = sadd.s32 1, %s24
      %s34 = scalar_select %p31, %s33, %s24
      %p35 = scmp.ge.s32.totalorder %s34, 2
      %s36 = scalar_select %p35, 0, %s34
      %s38 = sadd.s32 %s37, 1
      %p41 = scmp.eq.s32.totalorder %s17, 3
      %p42 = scmp.ne.s32.totalorder %s37, %s39
      %p43 = scmp.eq.s32.totalorder %s17, 0
      %p44 = por %p42, %p43
      %p45 = scmp.ne.s32.totalorder %s37, %s39
      %p46 = scmp.eq.s32.totalorder %s22, 3
      %p47 = por %p45, %p46
      %p48 = scmp.ne.s32.totalorder %s39, %s40
      %p49 = scmp.eq.s32.totalorder %s22, 0
      %p50 = por %p48, %p49
      %p51 = scmp.ne.s32.totalorder %s39, %s40
      %p52 = scmp.eq.s32.totalorder %s23, 3
      %p53 = por %p51, %p52
      %p55 = scmp.ne.s32.totalorder %s40, %s54
      %p56 = scmp.eq.s32.totalorder %s23, 0
      %p57 = por %p55, %p56
      %s58 = ssub.s32 %s24, %s36
      %s59 = ssub.s32 %s25, %s32
      %s60 = sor.u32 %s58, %s59
      %p61 = scmp.eq.s32.totalorder %s60, 0
      %s63 = sadd.s32 %s62, 1
      %s64 = scalar_select %p61, %s62, %s63
      %p67 = pneg %p61
      %p68 = scmp.eq.s32.totalorder %s17, 3
      %p69 = por %p67, %p68
      %p70 = scmp.ne.s32.totalorder %s62, %s65
      %p71 = scmp.eq.s32.totalorder %s17, 0
      %p72 = por %p70, %p71
      %p73 = scmp.ne.s32.totalorder %s62, %s65
      %p74 = scmp.eq.s32.totalorder %s22, 3
      %p75 = por %p73, %p74
      %p76 = scmp.ne.s32.totalorder %s65, %s66
      %p77 = scmp.eq.s32.totalorder %s22, 0
      %p78 = por %p76, %p77
      %p79 = scmp.ne.s32.totalorder %s65, %s66
      %p80 = scmp.eq.s32.totalorder %s23, 3
      %p81 = por %p79, %p80
      %p83 = scmp.ne.s32.totalorder %s66, %s82
      %p84 = scmp.eq.s32.totalorder %s23, 0
      %p85 = por %p83, %p84
      %p86 = scmp.le.s32.totalorder 1, %s17
      %p87 = scmp.lt.s32.totalorder %s17, 5
      %p88 = pnand %p86, %p87
      %p89 = pneg %p88
      // Predicated region
      $region9: #{tpu_custom_call.1} parent=5 // pred_check
        _
      $region10: #{tpu_custom_call.1} parent=5 // pred_check_branch
        %91 = sbr.rel (%p88) target = $region12
      $region11: #{tpu_custom_call.1} parent=5 // pred_region
        %s92 = ssub.s32 %s17, 1
        // Predicated region
        $region13: #{tpu_custom_call.1} parent=11 // pred_check
          %p93 = pneg %p50
        $region14: #{tpu_custom_call.1} parent=11 // pred_check_branch
          %95 = sbr.rel (%p93) target = $region16
        $region15: #{tpu_custom_call.1} parent=11 // pred_region
          %s97 = ssub.s32 2048, 2048
          %98 = vsyncadd [#allocation7], %s97
          %s99 = sshll.u32 [#allocation6], 4
          %s100 = int_to_ptr.vmem [resolvable:$true] %s99
          %105 = dma.hbm_to_vmem [thread:$0]  %s2, 2048, %s100, [#allocation7], 128, 128, 8
        $region16: #{tpu_custom_call.1} parent=11 // pred_fallthru
          _
      $region12: #{tpu_custom_call.1} parent=5 // pred_fallthru
        _
      %p106 = scmp.lt.s32.totalorder %s17, 4
      // Predicated region
      $region17: #{tpu_custom_call.1} parent=5 // pred_check
        %p107 = pneg %p106
      $region18: #{tpu_custom_call.1} parent=5 // pred_check_branch
        %109 = sbr.rel (%p107) target = $region20
      $region19: #{tpu_custom_call.1} parent=5 // pred_region
        _
      $region20: #{tpu_custom_call.1} parent=5 // pred_fallthru
        _
      %p110 = scmp.le.s32.totalorder 1, %s17
      %p111 = scmp.lt.s32.totalorder %s17, 5
      %p112 = pnand %p110, %p111
      %p113 = pneg %p112
      // Predicated region
      $region21: #{tpu_custom_call.1} parent=5 // pred_check
        _
      $region22: #{tpu_custom_call.1} parent=5 // pred_check_branch
        %115 = sbr.rel (%p112) target = $region24
      $region23: #{tpu_custom_call.1} parent=5 // pred_region
        %s116 = ssub.s32 %s17, 1
        // Predicated region
        $region25: #{tpu_custom_call.1} parent=23 // pred_check
          %p117 = pneg %p50
        $region26: #{tpu_custom_call.1} parent=23 // pred_check_branch
          %119 = sbr.rel (%p117) target = $region28
        $region27: #{tpu_custom_call.1} parent=23 // pred_region
          %120 = dma.done [#allocation7], 2048
        $region28: #{tpu_custom_call.1} parent=23 // pred_fallthru
          _
        %p121 = pneg %p50
        %p122 = pneg %p47
        %p123 = pneg %p78
        %p124 = pneg %p75
        %s125 = sand.u32 %s65, 1
        %s126 = scalar_lea.sflag [#allocation8], %s125
        %s127 = sand.u32 %s65, 1
        %s128 = smul.addr %s127, 64
        %s129 = scalar_lea.vmem [#allocation9], %s128
        %s130 = smul.u32 8, %s27
        %s131 = smul.u32 %s27, 64
        loop: start=0, step=1, limit=64
        $region29: #{tpu_custom_call.1} parent=23 // loop_pre_header
          _
        $region30: #{tpu_custom_call.1} parent=23 // loop_header
          %s133 = sphi 0, %s137
          %p134 = scmp.ge.s32.totalorder %s133, 64
        $region31: #{tpu_custom_call.1} parent=23 // loop_header_branch
          %136 = sbr.rel (%p134) target = $region35
        $region32: #{tpu_custom_call.1} parent=23 // loop_body
          %s138 = sadd.s32 %s131, %s133
          %s139 = sshra.s32 %s138, 7
          %s140 = sand.u32 %s138, 127
          %s141 = sadd.s32 %s139, %s26
          %s142 = smul.u32 %s141, 128
          %s143 = sshra.s32 %s138, 7
          %s144 = sand.u32 %s138, 127
          %s145 = sadd.s32 %s142, %s144
          %s146 = sld [smem:[#allocation5 + %s145]]
          %s147 = smul.addr %s146, 16
          %s148 = scalar_lea.hbm %s1, %s147
          %s149 = scalar_lea.vmem [#allocation2], %s133
          %s150 = scalar_lea.sflag [#allocation3], %s133
          // Predicated region
          $region36: #{tpu_custom_call.1} parent=32 // pred_check
            _
          $region37: #{tpu_custom_call.1} parent=32 // pred_check_branch
            %152 = sbr.rel target = $region39
          $region38: #{tpu_custom_call.1} parent=32 // pred_region
            %153 = sst [smem:[#allocation12]] [#allocation11]
            %154 = sst [smem:[#allocation13]] [#allocation10]
          $region39: #{tpu_custom_call.1} parent=32 // pred_fallthru
            _
          %156 = shalt.err (0)
          %s158 = sshll.u32 %s149, 4
          %s159 = int_to_ptr.vmem [resolvable:$true] %s158
          %161 = dma.hbm_to_vmem [thread:$0]  %s148, 16, %s159, %s150
        $region33: #{tpu_custom_call.1} parent=23 // loop_footer
          %s137 = sadd.s32 1, %s133
        $region34: #{tpu_custom_call.1} parent=23 // loop_footer_branch
          %132 = sbr.rel target = $region30
        $region35: #{tpu_custom_call.1} parent=23 // loop_exit
          _
        loop: start=0, step=1, limit=64
        $region40: #{tpu_custom_call.1} parent=23 // loop_pre_header
          _
        $region41: #{tpu_custom_call.1} parent=23 // loop_header
          %s163 = sphi 0, %s167
          %p164 = scmp.ge.s32.totalorder %s163, 64
        $region42: #{tpu_custom_call.1} parent=23 // loop_header_branch
          %166 = sbr.rel (%p164) target = $region46
        $region43: #{tpu_custom_call.1} parent=23 // loop_body
          %s168 = scalar_lea.sflag [#allocation3], %s163
          %s169 = smul.u32 1, 1
          %s170 = sshll.u32 %s169, 4
          %171 = dma.done %s168, %s170
        $region44: #{tpu_custom_call.1} parent=23 // loop_footer
          %s167 = sadd.s32 1, %s163
        $region45: #{tpu_custom_call.1} parent=23 // loop_footer_branch
          %162 = sbr.rel target = $region41
        $region46: #{tpu_custom_call.1} parent=23 // loop_exit
          _
        %v172 = vld [vmem:[#allocation2] sm:$0xff]
        %v173 = vld [vmem:[#allocation2 + $0x8] sm:$0xff]
        %v174 = vld [vmem:[#allocation2 + $0x10] sm:$0xff]
        %v175 = vld [vmem:[#allocation2 + $0x18] sm:$0xff]
        %v176 = vld [vmem:[#allocation2 + $0x20] sm:$0xff]
        %v177 = vld [vmem:[#allocation2 + $0x28] sm:$0xff]
        %v178 = vld [vmem:[#allocation2 + $0x30] sm:$0xff]
        %v179 = vld [vmem:[#allocation2 + $0x38] sm:$0xff]
        %s180 = scalar_lea.vmem [#allocation6], %s131
        %v181 = vld [vmem:[%s180] sm:$0xff]
        %v182 = vld [vmem:[%s180 + $0x8] sm:$0xff]
        %v183 = vld [vmem:[%s180 + $0x10] sm:$0xff]
        %v184 = vld [vmem:[%s180 + $0x18] sm:$0xff]
        %v185 = vld [vmem:[%s180 + $0x20] sm:$0xff]
        %v186 = vld [vmem:[%s180 + $0x28] sm:$0xff]
        %v187 = vld [vmem:[%s180 + $0x30] sm:$0xff]
        %v188 = vld [vmem:[%s180 + $0x38] sm:$0xff]
        %v189 = vadd.f32 %v172, %v181
        %v190 = vadd.f32 %v173, %v182
        %v191 = vadd.f32 %v174, %v183
        %v192 = vadd.f32 %v175, %v184
        %v193 = vadd.f32 %v176, %v185
        %v194 = vadd.f32 %v177, %v186
        %v195 = vadd.f32 %v178, %v187
        %v196 = vadd.f32 %v179, %v188
        %197 = vst [vmem:[%s129] sm:$0xff] %v189
        %198 = vst [vmem:[%s129 + $0x8] sm:$0xff] %v190
        %199 = vst [vmem:[%s129 + $0x10] sm:$0xff] %v191
        %200 = vst [vmem:[%s129 + $0x18] sm:$0xff] %v192
        %201 = vst [vmem:[%s129 + $0x20] sm:$0xff] %v193
        %202 = vst [vmem:[%s129 + $0x28] sm:$0xff] %v194
        %203 = vst [vmem:[%s129 + $0x30] sm:$0xff] %v195
        %204 = vst [vmem:[%s129 + $0x38] sm:$0xff] %v196
        %s205 = sand.u32 %s65, 1
        %s206 = scalar_lea.sflag [#allocation8], %s205
        %s207 = sand.u32 %s65, 1
        %s208 = smul.addr %s207, 64
        %s209 = scalar_lea.vmem [#allocation9], %s208
        // Predicated region
        $region47: #{tpu_custom_call.1} parent=23 // pred_check
          %p210 = pneg %p75
        $region48: #{tpu_custom_call.1} parent=23 // pred_check_branch
          %212 = sbr.rel (%p210) target = $region50
        $region49: #{tpu_custom_call.1} parent=23 // pred_region
          %s213 = smul.u32 8, %s27
          %s215 = ssub.s32 1024, 1024
          %216 = vsyncadd %s206, %s215
          %s217 = smul.addr %s26, 16
          %s218 = sadd.s32 %s213, %s217
          %s219 = smul.addr %s218, 128
          %s220 = scalar_lea.hbm %s3, %s219
          %s221 = sshll.u32 %s209, 4
          %s222 = int_to_ptr.vmem [resolvable:$true] %s221
          %227 = dma.vmem_to_hbm [thread:$0]  %s222, 1024, %s220, %s206, 128, 128, 8
        $region50: #{tpu_custom_call.1} parent=23 // pred_fallthru
          _
      $region24: #{tpu_custom_call.1} parent=5 // pred_fallthru
        _
      %p228 = scmp.le.s32.totalorder 2, %s17
      // Predicated region
      $region51: #{tpu_custom_call.1} parent=5 // pred_check
        %p229 = pneg %p228
      $region52: #{tpu_custom_call.1} parent=5 // pred_check_branch
        %231 = sbr.rel (%p229) target = $region54
      $region53: #{tpu_custom_call.1} parent=5 // pred_region
        %s232 = ssub.s32 %s17, 2
        // Predicated region
        $region55: #{tpu_custom_call.1} parent=53 // pred_check
          %p233 = pneg %p81
        $region56: #{tpu_custom_call.1} parent=53 // pred_check_branch
          %235 = sbr.rel (%p233) target = $region58
        $region57: #{tpu_custom_call.1} parent=53 // pred_region
          %s236 = sand.u32 %s66, 1
          %s237 = scalar_lea.sflag [#allocation8], %s236
          %s238 = sand.u32 %s66, 1
          %s239 = smul.addr %s238, 64
          %s240 = scalar_lea.vmem [#allocation9], %s239
          %241 = dma.done %s237, 1024
        $region58: #{tpu_custom_call.1} parent=53 // pred_fallthru
          _
      $region54: #{tpu_custom_call.1} parent=5 // pred_fallthru
        _
    $region6: #{tpu_custom_call.1} parent=1 // loop_footer
      %s21 = sadd.s32 1, %s17
    $region7: #{tpu_custom_call.1} parent=1 // loop_footer_branch
      %16 = sbr.rel target = $region3
    $region8: #{tpu_custom_call.1} parent=1 // loop_exit
      _
    %242 = vsyncpa [#allocation7], 1
    %s243 = scalar_lea.sflag [#allocation7], 1
    %244 = vsyncpa %s243, 1
    %245 = vsyncpa [#allocation8], 1
    %s246 = scalar_lea.sflag [#allocation8], 1
    %247 = vsyncpa %s246, 1
  %248 = vsyncmov [#allocation3]
  %s249 = vpop.sfrf %248
  %p250 = scmp.eq.s32.totalorder %s249, 0
  %p251 = pneg %p250
  %253 = shalt.err (%p251)
  %s254 = scalar_lea.sflag [#allocation3], 1
  %255 = vsyncmov %s254
  %s256 = vpop.sfrf %255
  %p257 = scmp.eq.s32.totalorder %s256, 0
  %p258 = pneg %p257
  %260 = shalt.err (%p258)
  %s261 = scalar_lea.sflag [#allocation3], 2
  %262 = vsyncmov %s261
  %s263 = vpop.sfrf %262
  %p264 = scmp.eq.s32.totalorder %s263, 0
  %p265 = pneg %p264
  %267 = shalt.err (%p265)
  %s268 = scalar_lea.sflag [#allocation3], 3
  %269 = vsyncmov %s268
  %s270 = vpop.sfrf %269
  %p271 = scmp.eq.s32.totalorder %s270, 0
  %p272 = pneg %p271
  %274 = shalt.err (%p272)
  %s275 = scalar_lea.sflag [#allocation3], 4
  %276 = vsyncmov %s275
  %s277 = vpop.sfrf %276
  %p278 = scmp.eq.s32.totalorder %s277, 0
  %p279 = pneg %p278
  %281 = shalt.err (%p279)
  %s282 = scalar_lea.sflag [#allocation3], 5
  %283 = vsyncmov %s282
  %s284 = vpop.sfrf %283
  %p285 = scmp.eq.s32.totalorder %s284, 0
  %p286 = pneg %p285
  %288 = shalt.err (%p286)
  %s289 = scalar_lea.sflag [#allocation3], 6
  %290 = vsyncmov %s289
  %s291 = vpop.sfrf %290
  %p292 = scmp.eq.s32.totalorder %s291, 0
  %p293 = pneg %p292
  %295 = shalt.err (%p293)
  %s296 = scalar_lea.sflag [#allocation3], 7
  %297 = vsyncmov %s296
  %s298 = vpop.sfrf %297
  %p299 = scmp.eq.s32.totalorder %s298, 0
  %p300 = pneg %p299
  %302 = shalt.err (%p300)
  %s303 = scalar_lea.sflag [#allocation3], 8
  %304 = vsyncmov %s303
  %s305 = vpop.sfrf %304
  %p306 = scmp.eq.s32.totalorder %s305, 0
  %p307 = pneg %p306
  %309 = shalt.err (%p307)
  %s310 = scalar_lea.sflag [#allocation3], 9
  %311 = vsyncmov %s310
  %s312 = vpop.sfrf %311
  %p313 = scmp.eq.s32.totalorder %s312, 0
  %p314 = pneg %p313
  %316 = shalt.err (%p314)
  %s317 = scalar_lea.sflag [#allocation3], 10
  %318 = vsyncmov %s317
  %s319 = vpop.sfrf %318
  %p320 = scmp.eq.s32.totalorder %s319, 0
  %p321 = pneg %p320
  %323 = shalt.err (%p321)
  %s324 = scalar_lea.sflag [#allocation3], 11
  %325 = vsyncmov %s324
  %s326 = vpop.sfrf %325
  %p327 = scmp.eq.s32.totalorder %s326, 0
  %p328 = pneg %p327
  %330 = shalt.err (%p328)
  %s331 = scalar_lea.sflag [#allocation3], 12
  %332 = vsyncmov %s331
  %s333 = vpop.sfrf %332
  %p334 = scmp.eq.s32.totalorder %s333, 0
  %p335 = pneg %p334
  %337 = shalt.err (%p335)
  %s338 = scalar_lea.sflag [#allocation3], 13
  %339 = vsyncmov %s338
  %s340 = vpop.sfrf %339
  %p341 = scmp.eq.s32.totalorder %s340, 0
  %p342 = pneg %p341
  %344 = shalt.err (%p342)
  %s345 = scalar_lea.sflag [#allocation3], 14
  %346 = vsyncmov %s345
  %s347 = vpop.sfrf %346
  %p348 = scmp.eq.s32.totalorder %s347, 0
  %p349 = pneg %p348
  %351 = shalt.err (%p349)
  %s352 = scalar_lea.sflag [#allocation3], 15
  %353 = vsyncmov %s352
  %s354 = vpop.sfrf %353
  %p355 = scmp.eq.s32.totalorder %s354, 0
  %p356 = pneg %p355
  %358 = shalt.err (%p356)
  %s359 = scalar_lea.sflag [#allocation3], 16
  %360 = vsyncmov %s359
  %s361 = vpop.sfrf %360
  %p362 = scmp.eq.s32.totalorder %s361, 0
  %p363 = pneg %p362
  %365 = shalt.err (%p363)
  %s366 = scalar_lea.sflag [#allocation3], 17
  %367 = vsyncmov %s366
  %s368 = vpop.sfrf %367
  %p369 = scmp.eq.s32.totalorder %s368, 0
  %p370 = pneg %p369
  %372 = shalt.err (%p370)
  %s373 = scalar_lea.sflag [#allocation3], 18
  %374 = vsyncmov %s373
  %s375 = vpop.sfrf %374
  %p376 = scmp.eq.s32.totalorder %s375, 0
  %p377 = pneg %p376
  %379 = shalt.err (%p377)
  %s380 = scalar_lea.sflag [#allocation3], 19
  %381 = vsyncmov %s380
  %s382 = vpop.sfrf %381
  %p383 = scmp.eq.s32.totalorder %s382, 0
  %p384 = pneg %p383
  %386 = shalt.err (%p384)
  %s387 = scalar_lea.sflag [#allocation3], 20
  %388 = vsyncmov %s387
  %s389 = vpop.sfrf %388
  %p390 = scmp.eq.s32.totalorder %s389, 0
  %p391 = pneg %p390
  %393 = shalt.err (%p391)
  %s394 = scalar_lea.sflag [#allocation3], 21
  %395 = vsyncmov %s394
  %s396 = vpop.sfrf %395
  %p397 = scmp.eq.s32.totalorder %s396, 0
  %p398 = pneg %p397
  %400 = shalt.err (%p398)
  %s401 = scalar_lea.sflag [#allocation3], 22
  %402 = vsyncmov %s401
  %s403 = vpop.sfrf %402
  %p404 = scmp.eq.s32.totalorder %s403, 0
  %p405 = pneg %p404
  %407 = shalt.err (%p405)
  %s408 = scalar_lea.sflag [#allocation3], 23
  %409 = vsyncmov %s408
  %s410 = vpop.sfrf %409
  %p411 = scmp.eq.s32.totalorder %s410, 0
  %p412 = pneg %p411
  %414 = shalt.err (%p412)
  %s415 = scalar_lea.sflag [#allocation3], 24
  %416 = vsyncmov %s415
  %s417 = vpop.sfrf %416
  %p418 = scmp.eq.s32.totalorder %s417, 0
  %p419 = pneg %p418
  %421 = shalt.err (%p419)
  %s422 = scalar_lea.sflag [#allocation3], 25
  %423 = vsyncmov %s422
  %s424 = vpop.sfrf %423
  %p425 = scmp.eq.s32.totalorder %s424, 0
  %p426 = pneg %p425
  %428 = shalt.err (%p426)
  %s429 = scalar_lea.sflag [#allocation3], 26
  %430 = vsyncmov %s429
  %s431 = vpop.sfrf %430
  %p432 = scmp.eq.s32.totalorder %s431, 0
  %p433 = pneg %p432
  %435 = shalt.err (%p433)
  %s436 = scalar_lea.sflag [#allocation3], 27
  %437 = vsyncmov %s436
  %s438 = vpop.sfrf %437
  %p439 = scmp.eq.s32.totalorder %s438, 0
  %p440 = pneg %p439
  %442 = shalt.err (%p440)
  %s443 = scalar_lea.sflag [#allocation3], 28
  %444 = vsyncmov %s443
  %s445 = vpop.sfrf %444
  %p446 = scmp.eq.s32.totalorder %s445, 0
  %p447 = pneg %p446
  %449 = shalt.err (%p447)
  %s450 = scalar_lea.sflag [#allocation3], 29
  %451 = vsyncmov %s450
  %s452 = vpop.sfrf %451
  %p453 = scmp.eq.s32.totalorder %s452, 0
  %p454 = pneg %p453
  %456 = shalt.err (%p454)
  %s457 = scalar_lea.sflag [#allocation3], 30
  %458 = vsyncmov %s457
  %s459 = vpop.sfrf %458
  %p460 = scmp.eq.s32.totalorder %s459, 0
  %p461 = pneg %p460
  %463 = shalt.err (%p461)
  %s464 = scalar_lea.sflag [#allocation3], 31
  %465 = vsyncmov %s464
  %s466 = vpop.sfrf %465
  %p467 = scmp.eq.s32.totalorder %s466, 0
  %p468 = pneg %p467
  %470 = shalt.err (%p468)
  %s471 = scalar_lea.sflag [#allocation3], 32
  %472 = vsyncmov %s471
  %s473 = vpop.sfrf %472
  %p474 = scmp.eq.s32.totalorder %s473, 0
  %p475 = pneg %p474
  %477 = shalt.err (%p475)
  %s478 = scalar_lea.sflag [#allocation3], 33
  %479 = vsyncmov %s478
  %s480 = vpop.sfrf %479
  %p481 = scmp.eq.s32.totalorder %s480, 0
  %p482 = pneg %p481
  %484 = shalt.err (%p482)
  %s485 = scalar_lea.sflag [#allocation3], 34
  %486 = vsyncmov %s485
  %s487 = vpop.sfrf %486
  %p488 = scmp.eq.s32.totalorder %s487, 0
  %p489 = pneg %p488
  %491 = shalt.err (%p489)
  %s492 = scalar_lea.sflag [#allocation3], 35
  %493 = vsyncmov %s492
  %s494 = vpop.sfrf %493
  %p495 = scmp.eq.s32.totalorder %s494, 0
  %p496 = pneg %p495
  %498 = shalt.err (%p496)
  %s499 = scalar_lea.sflag [#allocation3], 36
  %500 = vsyncmov %s499
  %s501 = vpop.sfrf %500
  %p502 = scmp.eq.s32.totalorder %s501, 0
  %p503 = pneg %p502
  %505 = shalt.err (%p503)
  %s506 = scalar_lea.sflag [#allocation3], 37
  %507 = vsyncmov %s506
  %s508 = vpop.sfrf %507
  %p509 = scmp.eq.s32.totalorder %s508, 0
  %p510 = pneg %p509
  %512 = shalt.err (%p510)
  %s513 = scalar_lea.sflag [#allocation3], 38
  %514 = vsyncmov %s513
  %s515 = vpop.sfrf %514
  %p516 = scmp.eq.s32.totalorder %s515, 0
  %p517 = pneg %p516
  %519 = shalt.err (%p517)
  %s520 = scalar_lea.sflag [#allocation3], 39
  %521 = vsyncmov %s520
  %s522 = vpop.sfrf %521
  %p523 = scmp.eq.s32.totalorder %s522, 0
  %p524 = pneg %p523
  %526 = shalt.err (%p524)
  %s527 = scalar_lea.sflag [#allocation3], 40
  %528 = vsyncmov %s527
  %s529 = vpop.sfrf %528
  %p530 = scmp.eq.s32.totalorder %s529, 0
  %p531 = pneg %p530
  %533 = shalt.err (%p531)
  %s534 = scalar_lea.sflag [#allocation3], 41
  %535 = vsyncmov %s534
  %s536 = vpop.sfrf %535
  %p537 = scmp.eq.s32.totalorder %s536, 0
  %p538 = pneg %p537
  %540 = shalt.err (%p538)
  %s541 = scalar_lea.sflag [#allocation3], 42
  %542 = vsyncmov %s541
  %s543 = vpop.sfrf %542
  %p544 = scmp.eq.s32.totalorder %s543, 0
  %p545 = pneg %p544
  %547 = shalt.err (%p545)
  %s548 = scalar_lea.sflag [#allocation3], 43
  %549 = vsyncmov %s548
  %s550 = vpop.sfrf %549
  %p551 = scmp.eq.s32.totalorder %s550, 0
  %p552 = pneg %p551
  %554 = shalt.err (%p552)
  %s555 = scalar_lea.sflag [#allocation3], 44
  %556 = vsyncmov %s555
  %s557 = vpop.sfrf %556
  %p558 = scmp.eq.s32.totalorder %s557, 0
  %p559 = pneg %p558
  %561 = shalt.err (%p559)
  %s562 = scalar_lea.sflag [#allocation3], 45
  %563 = vsyncmov %s562
  %s564 = vpop.sfrf %563
  %p565 = scmp.eq.s32.totalorder %s564, 0
  %p566 = pneg %p565
  %568 = shalt.err (%p566)
  %s569 = scalar_lea.sflag [#allocation3], 46
  %570 = vsyncmov %s569
  %s571 = vpop.sfrf %570
  %p572 = scmp.eq.s32.totalorder %s571, 0
  %p573 = pneg %p572
  %575 = shalt.err (%p573)
  %s576 = scalar_lea.sflag [#allocation3], 47
  %577 = vsyncmov %s576
  %s578 = vpop.sfrf %577
  %p579 = scmp.eq.s32.totalorder %s578, 0
  %p580 = pneg %p579
  %582 = shalt.err (%p580)
  %s583 = scalar_lea.sflag [#allocation3], 48
  %584 = vsyncmov %s583
  %s585 = vpop.sfrf %584
  %p586 = scmp.eq.s32.totalorder %s585, 0
  %p587 = pneg %p586
  %589 = shalt.err (%p587)
  %s590 = scalar_lea.sflag [#allocation3], 49
  %591 = vsyncmov %s590
  %s592 = vpop.sfrf %591
  %p593 = scmp.eq.s32.totalorder %s592, 0
  %p594 = pneg %p593
  %596 = shalt.err (%p594)
  %s597 = scalar_lea.sflag [#allocation3], 50
  %598 = vsyncmov %s597
  %s599 = vpop.sfrf %598
  %p600 = scmp.eq.s32.totalorder %s599, 0
  %p601 = pneg %p600
  %603 = shalt.err (%p601)
  %s604 = scalar_lea.sflag [#allocation3], 51
  %605 = vsyncmov %s604
  %s606 = vpop.sfrf %605
  %p607 = scmp.eq.s32.totalorder %s606, 0
  %p608 = pneg %p607
  %610 = shalt.err (%p608)
  %s611 = scalar_lea.sflag [#allocation3], 52
  %612 = vsyncmov %s611
  %s613 = vpop.sfrf %612
  %p614 = scmp.eq.s32.totalorder %s613, 0
  %p615 = pneg %p614
  %617 = shalt.err (%p615)
  %s618 = scalar_lea.sflag [#allocation3], 53
  %619 = vsyncmov %s618
  %s620 = vpop.sfrf %619
  %p621 = scmp.eq.s32.totalorder %s620, 0
  %p622 = pneg %p621
  %624 = shalt.err (%p622)
  %s625 = scalar_lea.sflag [#allocation3], 54
  %626 = vsyncmov %s625
  %s627 = vpop.sfrf %626
  %p628 = scmp.eq.s32.totalorder %s627, 0
  %p629 = pneg %p628
  %631 = shalt.err (%p629)
  %s632 = scalar_lea.sflag [#allocation3], 55
  %633 = vsyncmov %s632
  %s634 = vpop.sfrf %633
  %p635 = scmp.eq.s32.totalorder %s634, 0
  %p636 = pneg %p635
  %638 = shalt.err (%p636)
  %s639 = scalar_lea.sflag [#allocation3], 56
  %640 = vsyncmov %s639
  %s641 = vpop.sfrf %640
  %p642 = scmp.eq.s32.totalorder %s641, 0
  %p643 = pneg %p642
  %645 = shalt.err (%p643)
  %s646 = scalar_lea.sflag [#allocation3], 57
  %647 = vsyncmov %s646
  %s648 = vpop.sfrf %647
  %p649 = scmp.eq.s32.totalorder %s648, 0
  %p650 = pneg %p649
  %652 = shalt.err (%p650)
  %s653 = scalar_lea.sflag [#allocation3], 58
  %654 = vsyncmov %s653
  %s655 = vpop.sfrf %654
  %p656 = scmp.eq.s32.totalorder %s655, 0
  %p657 = pneg %p656
  %659 = shalt.err (%p657)
  %s660 = scalar_lea.sflag [#allocation3], 59
  %661 = vsyncmov %s660
  %s662 = vpop.sfrf %661
  %p663 = scmp.eq.s32.totalorder %s662, 0
  %p664 = pneg %p663
  %666 = shalt.err (%p664)
  %s667 = scalar_lea.sflag [#allocation3], 60
  %668 = vsyncmov %s667
  %s669 = vpop.sfrf %668
  %p670 = scmp.eq.s32.totalorder %s669, 0
  %p671 = pneg %p670
  %673 = shalt.err (%p671)
  %s674 = scalar_lea.sflag [#allocation3], 61
  %675 = vsyncmov %s674
  %s676 = vpop.sfrf %675
  %p677 = scmp.eq.s32.totalorder %s676, 0
  %p678 = pneg %p677
  %680 = shalt.err (%p678)
  %s681 = scalar_lea.sflag [#allocation3], 62
  %682 = vsyncmov %s681
  %s683 = vpop.sfrf %682
  %p684 = scmp.eq.s32.totalorder %s683, 0
  %p685 = pneg %p684
  %687 = shalt.err (%p685)
  %s688 = scalar_lea.sflag [#allocation3], 63
  %689 = vsyncmov %s688
  %s690 = vpop.sfrf %689
  %p691 = scmp.eq.s32.totalorder %s690, 0
  %p692 = pneg %p691
  %694 = shalt.err (%p692)

</llo_original>
